<compile_context>
chip_gen: v6e
topology: v6e:2x2x1
jax: 0.10.0
libtpu: 0.0.40
codegen_flags: <defaults>
</compile_context>

<pallas_src>
import functools

import numpy as np
import jax
import jax.numpy as jnp
from jax.experimental import pallas as pl
from jax.experimental.pallas import tpu as pltpu


# Conservative scoped-VMEM budget for tile sizing: fits v5e's ~16 MiB scoped
# default without raising vmem_limit_bytes; v6e/v7x (32 MiB scoped) have slack.
DEFAULT_VMEM_BUDGET = 12 * 1024 * 1024


def _round_up(x, m):
    return ((x + m - 1) // m) * m


def _shrink128(x):
    return max(128, (x // 2) // 128 * 128)


def _pick_tiles(n_rows, n_red, fp, tm, tk, vmem_budget):
    """Row/reduction tiles (multiples of 128) that fit the scoped-VMEM budget."""
    tm_ = min(_round_up(tm, 128), _round_up(max(n_rows, 1), 128))
    tk_ = min(_round_up(tk, 128), _round_up(max(n_red, 1), 128))

    def footprint(a, b):
        return (2 * b * fp * 2        # double-buffered bf16 values tile
                + a * fp * 4          # f32 accumulator scratch
                + 2 * a * fp * 4      # double-buffered output tile (<= f32)
                + 2 * (a + b) * 4)    # id tiles

    while footprint(tm_, tk_) > vmem_budget and (tm_ > 128 or tk_ > 128):
        if tk_ >= tm_ and tk_ > 128:
            tk_ = _shrink128(tk_)
        else:
            tm_ = _shrink128(tm_)
    return tm_, tk_


def _group_mean_kernel(tm, feat, fuse_counts, kmin_ref, kmax_ref,
                       grp_ref, gid_ref, val_ref, out_ref, acc_ref, cnt_ref):
    """acc[g, :] += sum_j [grp[g] == gid[j]] * val[j, :]; finalize -> mean (bf16).

    Grid: (group row tiles ["parallel"], nnz reduction tiles ["arbitrary"]).
    grp_ref: (TM, 1) i32   gid_ref: (1, TK) i32   val_ref: (TK, Fp) bf16
    out_ref: (TM, Fp) bf16 acc_ref: (TM, Fp) f32  cnt_ref: (TM, 1) f32
    kmin/kmax: per-reduction-tile [min, max] gid (SMEM scalar prefetch), used
    to skip k-tiles that cannot intersect this row tile's group range.
    """
    i = pl.program_id(0)
    k = pl.program_id(1)

    @pl.when(k == 0)
    def _init():
        acc_ref[...] = jnp.zeros_like(acc_ref)
        cnt_ref[...] = jnp.zeros_like(cnt_ref)

    row_lo = i * tm
    nonempty = jnp.logical_and(kmax_ref[k] >= row_lo, kmin_ref[k] < row_lo + tm)

    @pl.when(nonempty)
    def _step():
        eq = grp_ref[...] == gid_ref[...]              # (TM, TK) membership
        mask = eq.astype(jnp.bfloat16)                 # 0/1 exact in bf16
        acc_ref[...] += jnp.dot(mask, val_ref[...],
                                preferred_element_type=jnp.float32)
        if not fuse_counts:
            # Cross-lane reduce lands on the XLU slot (slack while MXU busy).
            cnt_ref[...] += jnp.sum(eq.astype(jnp.float32), axis=-1,
                                    keepdims=True)

    @pl.when(k == pl.num_programs(1) - 1)
    def _finalize():
        acc = acc_ref[...]
        counts = acc[:, feat:feat + 1] if fuse_counts else cnt_ref[...]
        # Empty / padded groups have count 0; they are never gathered back, so
        # the max() only prevents 0/0.
        inv = pl.reciprocal(jnp.maximum(counts, 1.0), approx=True)
        out_ref[...] = (acc * inv).astype(out_ref.dtype)


def _gather_resident_kernel(gid_ref, means_ref, out_ref):
    """out[e, :] = means[gid[e], :] with the whole means table resident in VMEM."""
    g_p = means_ref.shape[0]
    grp = jax.lax.broadcasted_iota(jnp.int32, (1, g_p), 1)
    mask = (gid_ref[...] == grp).astype(jnp.bfloat16)        # (TM, Gp)
    out_ref[...] = jnp.dot(mask, means_ref[...],
                           preferred_element_type=jnp.float32
                           ).astype(out_ref.dtype)


def _gather_tiled_kernel(tk, imin_ref, imax_ref, gid_ref, means_ref, out_ref):
    """out[e, :] += sum_g [gid[e] == g] * means[g, :], tiled over group tiles.

    Output block (f32) is resident across k -> accumulate directly, no scratch.
    imin/imax: per-row-tile [min, max] gid, used to skip non-overlapping
    group tiles.
    """
    i = pl.program_id(0)
    k = pl.program_id(1)

    @pl.when(k == 0)
    def _init():
        out_ref[...] = jnp.zeros_like(out_ref)

    col_lo = k * tk
    nonempty = jnp.logical_and(imax_ref[i] >= col_lo, imin_ref[i] < col_lo + tk)

    @pl.when(nonempty)
    def _step():
        grp = col_lo + jax.lax.broadcasted_iota(jnp.int32, (1, tk), 1)
        mask = (gid_ref[...] == grp).astype(jnp.bfloat16)
        out_ref[...] += jnp.dot(mask, means_ref[...],
                                preferred_element_type=jnp.float32)


def pool(indices, values, shape, axis=0, *, tm=512, tk=512,
         vmem_budget=DEFAULT_VMEM_BUDGET):
    """Pallas equivalent of Pool(axis).forward on a coalesced COO tensor.

    indices: (2, nnz) int, values: (nnz, F), shape: dense extents (R, C).
    """
    nnz, feat = values.shape
    n_groups = int(shape[1 - axis])
    gid = indices[1 - axis].astype(jnp.int32)

    fp = _round_up(feat, 128)           # lane-dense feature dim
    fuse_counts = feat < fp             # counts column rides a free padded lane
    # (when feat is already a multiple of 128 the counts use the XLU scratch
    #  instead of burning an extra 128-lane block of MXU/HBM work)

    # ------------------ pass A: per-group means (g_p, fp) -------------------
    tm_a, tk_a = _pick_tiles(n_groups, nnz, fp, tm, tk, vmem_budget)
    g_p = _round_up(max(n_groups, 1), tm_a)
    nnz_a = _round_up(max(nnz, 1), tk_a)

    # Single concat + pad (fused under jit); no multi-pass .at[].set() slab.
    vbf = values.astype(jnp.bfloat16)
    if fuse_counts:
        vbf = jnp.concatenate([vbf, jnp.ones((nnz, 1), jnp.bfloat16)], axis=1)
    vals_aug = jnp.pad(vbf, ((0, nnz_a - nnz), (0, fp - vbf.shape[1])))

    # Padded entries get gid = -1, which never equals a real group id (>= 0).
    gid_a = jnp.pad(gid, (0, nnz_a - nnz), constant_values=-1)
    kmin = gid_a.reshape(nnz_a // tk_a, tk_a).min(axis=1)
    kmax = gid_a.reshape(nnz_a // tk_a, tk_a).max(axis=1)
    grp_col = jnp.arange(g_p, dtype=jnp.int32).reshape(g_p, 1)

    means = pl.pallas_call(
        functools.partial(_group_mean_kernel, tm_a, feat, fuse_counts),
        out_shape=jax.ShapeDtypeStruct((g_p, fp), jnp.bfloat16),
        grid_spec=pltpu.PrefetchScalarGridSpec(
            num_scalar_prefetch=2,
            grid=(g_p // tm_a, nnz_a // tk_a),
            in_specs=[
                pl.BlockSpec((tm_a, 1), lambda i, k, *_: (i, 0)),   # group ids
                pl.BlockSpec((1, tk_a), lambda i, k, *_: (0, k)),   # nnz gids
                pl.BlockSpec((tk_a, fp), lambda i, k, *_: (k, 0)),  # values
            ],
            out_specs=pl.BlockSpec((tm_a, fp), lambda i, k, *_: (i, 0)),
            scratch_shapes=[pltpu.VMEM((tm_a, fp), jnp.float32),
                            pltpu.VMEM((tm_a, 1), jnp.float32)],
        ),
        compiler_params=pltpu.CompilerParams(
            dimension_semantics=("parallel", "arbitrary")),
    )(kmin, kmax, grp_col, gid_a.reshape(1, nnz_a), vals_aug)

    # -------------- pass B: gather group means back per nonzero -------------
    tm_b = min(_round_up(tm, 128), _round_up(max(nnz, 1), 128))
    resident_cost = (2 * g_p * fp * 2        # bf16 means (double-buffered)
                     + 2 * tm_b * fp * 4     # f32 output tiles
                     + 3 * tm_b * g_p)       # mask intermediates
    if resident_cost <= vmem_budget:
        # Whole means table resident in VMEM: 1-D grid, one dot per row tile,
        # no reduction axis / accumulator / re-streaming of the means.
        nnz_b = _round_up(max(nnz, 1), tm_b)
        gid_b = jnp.pad(gid, (0, nnz_b - nnz), constant_values=-1)
        gathered = pl.pallas_call(
            _gather_resident_kernel,
            out_shape=jax.ShapeDtypeStruct((nnz_b, fp), jnp.float32),
            grid_spec=pltpu.PrefetchScalarGridSpec(
                num_scalar_prefetch=0,
                grid=(nnz_b // tm_b,),
                in_specs=[
                    pl.BlockSpec((tm_b, 1), lambda i: (i, 0)),
                    pl.BlockSpec((g_p, fp), lambda i: (0, 0)),   # resident
                ],
                out_specs=pl.BlockSpec((tm_b, fp), lambda i: (i, 0)),
            ),
            compiler_params=pltpu.CompilerParams(
                dimension_semantics=("parallel",)),
        )(gid_b.reshape(nnz_b, 1), means)
    else:
        # Large group table: tile it along a reduction axis and skip group
        # tiles outside this row tile's [min, max] gid range.
        tm_b, tk_b = _pick_tiles(nnz, g_p, fp, tm, tk, vmem_budget)
        while g_p % tk_b:
            tk_b -= 128
        nnz_b = _round_up(max(nnz, 1), tm_b)
        gid_b = jnp.pad(gid, (0, nnz_b - nnz), constant_values=-1)
        imin = gid_b.reshape(nnz_b // tm_b, tm_b).min(axis=1)
        imax = gid_b.reshape(nnz_b // tm_b, tm_b).max(axis=1)
        gathered = pl.pallas_call(
            functools.partial(_gather_tiled_kernel, tk_b),
            out_shape=jax.ShapeDtypeStruct((nnz_b, fp), jnp.float32),
            grid_spec=pltpu.PrefetchScalarGridSpec(
                num_scalar_prefetch=2,
                grid=(nnz_b // tm_b, g_p // tk_b),
                in_specs=[
                    pl.BlockSpec((tm_b, 1), lambda i, k, *_: (i, 0)),
                    pl.BlockSpec((tk_b, fp), lambda i, k, *_: (k, 0)),
                ],
                out_specs=pl.BlockSpec((tm_b, fp), lambda i, k, *_: (i, 0)),
            ),
            compiler_params=pltpu.CompilerParams(
                dimension_semantics=("parallel", "arbitrary")),
        )(imin, imax, gid_b.reshape(nnz_b, 1), means)

    return gathered[:nnz, :feat].astype(values.dtype)


def pool_reference_np(indices, values, shape, axis=0):
    """NumPy re-implementation of the torch forward (for verification)."""
    idx = np.asarray(indices)
    val = np.asarray(values, np.float32)
    gid = idx[1 - axis]
    dim = shape[1 - axis]
    feat = val.shape[1]
    sums = np.zeros((dim, feat), np.float32)
    np.add.at(sums, gid, val)
    counts = np.zeros((dim, 1), np.float32)
    np.add.at(counts, gid, 1.0)
    mean = sums / np.maximum(counts, 1.0)   # empty groups never gathered
    return mean[gid]


if __name__ == "__main__":
    # Small deterministic sparse matrix: shape (R, C) with dense feature dim F.
    R, C, F = 8, 16, 4
    NNZ = 16

    key = jax.random.PRNGKey(0)
    k_idx, k_val = jax.random.split(key)

    # Unique (row, col) pairs -> already-coalesced COO indices.
    flat = jax.random.choice(k_idx, R * C, shape=(NNZ,), replace=False)
    flat = jnp.sort(flat).astype(jnp.int32)
    rows = flat // C
    cols = flat % C
    indices = jnp.stack([rows, cols], axis=0)                       # (2, NNZ)
    values = jax.random.normal(k_val, (NNZ, F), dtype=jnp.float32)  # (NNZ, F)

    pool_fn = jax.jit(pool, static_argnames=("shape", "axis"))

    for axis in (0, 1):
        out = jax.block_until_ready(
            pool_fn(indices, values, shape=(R, C), axis=axis))
        ref = pool_reference_np(indices, values, (R, C), axis=axis)
        assert out.shape == (NNZ, F)
        # bf16 MXU inputs (+ approx reciprocal) -> ~3 decimal digits.
        assert np.allclose(np.asarray(out, np.float32), ref,
                           atol=3e-2, rtol=3e-2), \
            float(np.abs(np.asarray(out, np.float32) - ref).max())

    print("KERNEL_OK")
</pallas_src>

<mosaic_0001>
module attributes {stable_mosaic.version = 11 : i64} {
  func.func @_gather_resident_kernel(%arg0: i32, %arg1: memref<128x1xi32, #tpu.memory_space<vmem>>, %arg2: memref<128x128xbf16, #tpu.memory_space<vmem>>, %arg3: memref<128x128xf32, #tpu.memory_space<vmem>>) attributes {dimension_semantics = [#tpu.dimension_semantics<parallel>], iteration_bounds = array<i64: 1>, scalar_prefetch = 0 : i64, scratch_operands = 0 : i64, tpu.core_type = #tpu.core_type<tc>, window_params = [{transform_indices = @transform_0, window_bounds = array<i64: 128, 1>}, {pipeline_mode = #tpu.pipeline_mode<synchronous>, transform_indices = @transform_1, window_bounds = array<i64: 128, 128>}, {transform_indices = @transform_2, window_bounds = array<i64: 128, 128>}]} {
    %0 = tpu.iota {dimensions = array<i32: 1>} : vector<1x128xi32>
    %c0 = arith.constant 0 : index
    %c0_0 = arith.constant 0 : index
    %1 = vector.load %arg1[%c0, %c0_0] : memref<128x1xi32, #tpu.memory_space<vmem>>, vector<128x1xi32>
    %2 = vector.broadcast %1 : vector<128x1xi32> to vector<128x128xi32>
    %3 = vector.broadcast %0 : vector<1x128xi32> to vector<128x128xi32>
    %4 = arith.cmpi eq, %2, %3 : vector<128x128xi32>
    %5 = arith.extui %4 : vector<128x128xi1> to vector<128x128xi32>
    %6 = arith.sitofp %5 : vector<128x128xi32> to vector<128x128xf32>
    %7 = arith.truncf %6 : vector<128x128xf32> to vector<128x128xbf16>
    %c0_1 = arith.constant 0 : index
    %c0_2 = arith.constant 0 : index
    %8 = vector.load %arg2[%c0_1, %c0_2] : memref<128x128xbf16, #tpu.memory_space<vmem>>, vector<128x128xbf16>
    %cst = arith.constant dense<0.000000e+00> : vector<128x128xf32>
    %9 = tpu.matmul %7, %8, %cst {dimension_numbers = #tpu.dot_dimension_numbers<[1], [0], [0], [1], [0, 0, 1, 1], [], []>} : vector<128x128xbf16>, vector<128x128xbf16>, vector<128x128xf32> -> vector<128x128xf32>
    %c0_3 = arith.constant 0 : index
    %c0_4 = arith.constant 0 : index
    %10 = vector.load %arg3[%c0_3, %c0_4] : memref<128x128xf32, #tpu.memory_space<vmem>>, vector<128x128xf32>
    tpu.vector_store %arg3[%c0_3, %c0_4], %9 {strides = array<i32>} : memref<128x128xf32, #tpu.memory_space<vmem>>, vector<128x128xf32>,
    return
  }
  func.func @transform_0(%arg0: i32) -> (i32, i32) {
    %c0_i32 = arith.constant 0 : i32
    %c0_i32_0 = arith.constant 0 : i32
    return %arg0, %c0_i32 : i32, i32
  }
  func.func @transform_1(%arg0: i32) -> (i32, i32) {
    %c0_i32 = arith.constant 0 : i32
    %c0_i32_0 = arith.constant 0 : i32
    %c0_i32_1 = arith.constant 0 : i32
    return %c0_i32, %c0_i32_0 : i32, i32
  }
  func.func @transform_2(%arg0: i32) -> (i32, i32) {
    %c0_i32 = arith.constant 0 : i32
    %c0_i32_0 = arith.constant 0 : i32
    return %arg0, %c0_i32 : i32, i32
  }
}

module attributes {stable_mosaic.version = 11 : i64} {
  func.func @_group_mean_kernel(%arg0: i32, %arg1: i32, %arg2: memref<1xi32, #tpu.memory_space<smem>>, %arg3: memref<1xi32, #tpu.memory_space<smem>>, %arg4: memref<128x1xi32, #tpu.memory_space<vmem>>, %arg5: memref<1x128xi32, #tpu.memory_space<vmem>>, %arg6: memref<128x128xbf16, #tpu.memory_space<vmem>>, %arg7: memref<128x128xbf16, #tpu.memory_space<vmem>>, %arg8: memref<128x128xf32, #tpu.memory_space<vmem>>, %arg9: memref<128x1xf32, #tpu.memory_space<vmem>>) attributes {dimension_semantics = [#tpu.dimension_semantics<parallel>, #tpu.dimension_semantics<arbitrary>], iteration_bounds = array<i64: 1, 1>, scalar_prefetch = 2 : i64, scratch_operands = 2 : i64, tpu.core_type = #tpu.core_type<tc>, window_params = [{transform_indices = @transform_0, window_bounds = array<i64: 128, 1>}, {transform_indices = @transform_1, window_bounds = array<i64: 1, 128>}, {transform_indices = @transform_2, window_bounds = array<i64: 128, 128>}, {transform_indices = @transform_3, window_bounds = array<i64: 128, 128>}]} {
    %c0_i32 = arith.constant 0 : i32
    %0 = arith.cmpi eq, %arg1, %c0_i32 : i32
    %1 = arith.extui %0 : i1 to i32
    %c0_i32_0 = arith.constant 0 : i32
    %2 = arith.cmpi ne, %1, %c0_i32_0 : i32
    scf.if %2 {
      %cst = arith.constant 0.000000e+00 : f32
      %17 = vector.broadcast %cst : f32 to vector<128x128xf32>
      %c0 = arith.constant 0 : index
      %c0_5 = arith.constant 0 : index
      %18 = vector.load %arg8[%c0, %c0_5] : memref<128x128xf32, #tpu.memory_space<vmem>>, vector<128x128xf32>
      tpu.vector_store %arg8[%c0, %c0_5], %17 {strides = array<i32>} : memref<128x128xf32, #tpu.memory_space<vmem>>, vector<128x128xf32>,
      %cst_6 = arith.constant 0.000000e+00 : f32
      %19 = vector.broadcast %cst_6 : f32 to vector<128x1xf32>
      %c0_7 = arith.constant 0 : index
      %c0_8 = arith.constant 0 : index
      %20 = vector.load %arg9[%c0_7, %c0_8] : memref<128x1xf32, #tpu.memory_space<vmem>>, vector<128x1xf32>
      tpu.vector_store %arg9[%c0_7, %c0_8], %19 {strides = array<i32>} : memref<128x1xf32, #tpu.memory_space<vmem>>, vector<128x1xf32>,
    } else {
    }
    %c128_i32 = arith.constant 128 : i32
    %3 = arith.muli %arg0, %c128_i32 : i32
    %4 = arith.index_cast %arg1 : i32 to index
    %5 = memref.load %arg3[%4] : memref<1xi32, #tpu.memory_space<smem>>
    %6 = arith.cmpi sge, %5, %3 : i32
    %7 = arith.index_cast %arg1 : i32 to index
    %8 = memref.load %arg2[%7] : memref<1xi32, #tpu.memory_space<smem>>
    %c128_i32_1 = arith.constant 128 : i32
    %9 = arith.addi %3, %c128_i32_1 : i32
    %10 = arith.cmpi slt, %8, %9 : i32
    %11 = arith.andi %6, %10 : i1
    %12 = arith.extui %11 : i1 to i32
    %c0_i32_2 = arith.constant 0 : i32
    %13 = arith.cmpi ne, %12, %c0_i32_2 : i32
    scf.if %13 {
      %c0 = arith.constant 0 : index
      %c0_5 = arith.constant 0 : index
      %17 = vector.load %arg4[%c0, %c0_5] : memref<128x1xi32, #tpu.memory_space<vmem>>, vector<128x1xi32>
      %c0_6 = arith.constant 0 : index
      %c0_7 = arith.constant 0 : index
      %18 = vector.load %arg5[%c0_6, %c0_7] : memref<1x128xi32, #tpu.memory_space<vmem>>, vector<1x128xi32>
      %19 = vector.broadcast %17 : vector<128x1xi32> to vector<128x128xi32>
      %20 = vector.broadcast %18 : vector<1x128xi32> to vector<128x128xi32>
      %21 = arith.cmpi eq, %19, %20 : vector<128x128xi32>
      %22 = arith.extui %21 : vector<128x128xi1> to vector<128x128xi32>
      %23 = arith.sitofp %22 : vector<128x128xi32> to vector<128x128xf32>
      %24 = arith.truncf %23 : vector<128x128xf32> to vector<128x128xbf16>
      %c0_8 = arith.constant 0 : index
      %c0_9 = arith.constant 0 : index
      %25 = vector.load %arg8[%c0_8, %c0_9] : memref<128x128xf32, #tpu.memory_space<vmem>>, vector<128x128xf32>
      %c0_10 = arith.constant 0 : index
      %c0_11 = arith.constant 0 : index
      %26 = vector.load %arg6[%c0_10, %c0_11] : memref<128x128xbf16, #tpu.memory_space<vmem>>, vector<128x128xbf16>
      %cst = arith.constant dense<0.000000e+00> : vector<128x128xf32>
      %27 = tpu.matmul %24, %26, %cst {dimension_numbers = #tpu.dot_dimension_numbers<[1], [0], [0], [1], [0, 0, 1, 1], [], []>} : vector<128x128xbf16>, vector<128x128xbf16>, vector<128x128xf32> -> vector<128x128xf32>
      %28 = arith.addf %25, %27 : vector<128x128xf32>
      %c0_12 = arith.constant 0 : index
      %c0_13 = arith.constant 0 : index
      %29 = vector.load %arg8[%c0_12, %c0_13] : memref<128x128xf32, #tpu.memory_space<vmem>>, vector<128x128xf32>
      tpu.vector_store %arg8[%c0_12, %c0_13], %28 {strides = array<i32>} : memref<128x128xf32, #tpu.memory_space<vmem>>, vector<128x128xf32>,
    } else {
    }
    %c0_i32_3 = arith.constant 0 : i32
    %14 = arith.cmpi eq, %arg1, %c0_i32_3 : i32
    %15 = arith.extui %14 : i1 to i32
    %c0_i32_4 = arith.constant 0 : i32
    %16 = arith.cmpi ne, %15, %c0_i32_4 : i32
    scf.if %16 {
      %c0 = arith.constant 0 : index
      %c0_5 = arith.constant 0 : index
      %17 = vector.load %arg8[%c0, %c0_5] : memref<128x128xf32, #tpu.memory_space<vmem>>, vector<128x128xf32>
      %18 = vector.extract_strided_slice %17 {offsets = [0, 4], sizes = [128, 1], strides = [1, 1]} : vector<128x128xf32> to vector<128x1xf32>
      %cst = arith.constant 1.000000e+00 : f32
      %19 = vector.broadcast %cst : f32 to vector<128x1xf32>
      %20 = arith.maximumf %18, %19 : vector<128x1xf32>
      %21 = tpu.reciprocal %20 {approx = true} : vector<128x1xf32> -> vector<128x1xf32>
      %22 = vector.broadcast %21 : vector<128x1xf32> to vector<128x128xf32>
      %23 = arith.mulf %17, %22 : vector<128x128xf32>
      %24 = arith.truncf %23 : vector<128x128xf32> to vector<128x128xbf16>
      %c0_6 = arith.constant 0 : index
      %c0_7 = arith.constant 0 : index
      %25 = vector.load %arg7[%c0_6, %c0_7] : memref<128x128xbf16, #tpu.memory_space<vmem>>, vector<128x128xbf16>
      tpu.vector_store %arg7[%c0_6, %c0_7], %24 {strides = array<i32>} : memref<128x128xbf16, #tpu.memory_space<vmem>>, vector<128x128xbf16>,
    } else {
    }
    return
  }
  func.func @transform_0(%arg0: i32, %arg1: i32, %arg2: memref<1xi32, #tpu.memory_space<smem>>, %arg3: memref<1xi32, #tpu.memory_space<smem>>) -> (i32, i32) {
    %c0_i32 = arith.constant 0 : i32
    %c0_i32_0 = arith.constant 0 : i32
    return %arg0, %c0_i32 : i32, i32
  }
  func.func @transform_1(%arg0: i32, %arg1: i32, %arg2: memref<1xi32, #tpu.memory_space<smem>>, %arg3: memref<1xi32, #tpu.memory_space<smem>>) -> (i32, i32) {
    %c0_i32 = arith.constant 0 : i32
    %c0_i32_0 = arith.constant 0 : i32
    return %c0_i32, %arg1 : i32, i32
  }
  func.func @transform_2(%arg0: i32, %arg1: i32, %arg2: memref<1xi32, #tpu.memory_space<smem>>, %arg3: memref<1xi32, #tpu.memory_space<smem>>) -> (i32, i32) {
    %c0_i32 = arith.constant 0 : i32
    %c0_i32_0 = arith.constant 0 : i32
    return %arg1, %c0_i32 : i32, i32
  }
  func.func @transform_3(%arg0: i32, %arg1: i32, %arg2: memref<1xi32, #tpu.memory_space<smem>>, %arg3: memref<1xi32, #tpu.memory_space<smem>>) -> (i32, i32) {
    %c0_i32 = arith.constant 0 : i32
    %c0_i32_0 = arith.constant 0 : i32
    return %arg0, %c0_i32 : i32, i32
  }
}

</mosaic_0001>

<llo_original>
// kernel: pool.3
$region0: #{pool.3}
  #allocation0 [shape = 'u32[]', space=smem, size = 0x4, offset = 0x4, fixed_abs, tag = 'smem constant byte address 0x4 - core index']
  #allocation1 [shape = 'u32[144,128]{1,0:T(1,128)}', space=vmem, size = 0x12000, scoped, tag = 'internal scratch']
  %s0 = inlined_call_operand.vmem [shape: s32[128,1], index: 0, kind: input, shape index: {}]
  %s1 = inlined_call_operand.vmem [shape: bf16[128,128], index: 1, kind: input, shape index: {}]
  %s2 = inlined_call_operand.vmem [shape: f32[128,128], index: 2, kind: output, shape index: {}]
  %s3 = sld [smem:[#allocation0]]
  $region18: #{pool.3} parent=0
    _
  %s5 = ssub.s32 1, %s3
  %s6 = scalar_select 0, %s5, %s3
  // Predicated region
  $region2: #{pool.3} parent=0 // pred_check
    _
  $region3: #{pool.3} parent=0 // pred_check_branch
    %8 = sbr.rel (0) target = $region5
  $region4: #{pool.3} parent=0 // pred_region
    _
  $region5: #{pool.3} parent=0 // pred_fallthru
    _
  // Predicated region
  $region6: #{pool.3} parent=0 // pred_check
    _
  $region7: #{pool.3} parent=0 // pred_check_branch
    %10 = sbr.rel (0) target = $region9
  $region8: #{pool.3} parent=0 // pred_region
    _
  $region9: #{pool.3} parent=0 // pred_fallthru
    _
  %v12 = vlaneseq
  %v13 = vand.u32 %v12, 127
  %v14 = vld [vmem:[%s0] sm:$0xff]
  %v15 = vld [vmem:[%s0 + $0x8] sm:$0xff]
  %v16 = vld [vmem:[%s0 + $0x10] sm:$0xff]
  %v17 = vld [vmem:[%s0 + $0x18] sm:$0xff]
  %v18 = vld [vmem:[%s0 + $0x20] sm:$0xff]
  %v19 = vld [vmem:[%s0 + $0x28] sm:$0xff]
  %v20 = vld [vmem:[%s0 + $0x30] sm:$0xff]
  %v21 = vld [vmem:[%s0 + $0x38] sm:$0xff]
  %v22 = vld [vmem:[%s0 + $0x40] sm:$0xff]
  %v23 = vld [vmem:[%s0 + $0x48] sm:$0xff]
  %v24 = vld [vmem:[%s0 + $0x50] sm:$0xff]
  %v25 = vld [vmem:[%s0 + $0x58] sm:$0xff]
  %v26 = vld [vmem:[%s0 + $0x60] sm:$0xff]
  %v27 = vld [vmem:[%s0 + $0x68] sm:$0xff]
  %v28 = vld [vmem:[%s0 + $0x70] sm:$0xff]
  %v29 = vld [vmem:[%s0 + $0x78] sm:$0xff]
  %30 = vset.pattern.permute.xlu0 0
  %31 = vperm.xlu0 %30, %v14
  %v32 = vpop.permute.xlu0 %31
  %33 = vset.pattern.permute.xlu0 0
  %34 = vperm.xlu0 %33, %v15
  %v35 = vpop.permute.xlu0 %34
  %36 = vset.pattern.permute.xlu0 0
  %37 = vperm.xlu0 %36, %v16
  %v38 = vpop.permute.xlu0 %37
  %39 = vset.pattern.permute.xlu0 0
  %40 = vperm.xlu0 %39, %v17
  %v41 = vpop.permute.xlu0 %40
  %42 = vset.pattern.permute.xlu0 0
  %43 = vperm.xlu0 %42, %v18
  %v44 = vpop.permute.xlu0 %43
  %45 = vset.pattern.permute.xlu0 0
  %46 = vperm.xlu0 %45, %v19
  %v47 = vpop.permute.xlu0 %46
  %48 = vset.pattern.permute.xlu0 0
  %49 = vperm.xlu0 %48, %v20
  %v50 = vpop.permute.xlu0 %49
  %51 = vset.pattern.permute.xlu0 0
  %52 = vperm.xlu0 %51, %v21
  %v53 = vpop.permute.xlu0 %52
  %54 = vset.pattern.permute.xlu0 0
  %55 = vperm.xlu0 %54, %v22
  %v56 = vpop.permute.xlu0 %55
  %57 = vset.pattern.permute.xlu0 0
  %58 = vperm.xlu0 %57, %v23
  %v59 = vpop.permute.xlu0 %58
  %60 = vset.pattern.permute.xlu0 0
  %61 = vperm.xlu0 %60, %v24
  %v62 = vpop.permute.xlu0 %61
  %63 = vset.pattern.permute.xlu0 0
  %64 = vperm.xlu0 %63, %v25
  %v65 = vpop.permute.xlu0 %64
  %66 = vset.pattern.permute.xlu0 0
  %67 = vperm.xlu0 %66, %v26
  %v68 = vpop.permute.xlu0 %67
  %69 = vset.pattern.permute.xlu0 0
  %70 = vperm.xlu0 %69, %v27
  %v71 = vpop.permute.xlu0 %70
  %72 = vset.pattern.permute.xlu0 0
  %73 = vperm.xlu0 %72, %v28
  %v74 = vpop.permute.xlu0 %73
  %75 = vset.pattern.permute.xlu0 0
  %76 = vperm.xlu0 %75, %v29
  %v77 = vpop.permute.xlu0 %76
  %vm78 = vcmp.eq.s32.totalorder %v32, %v13
  %vm79 = vcmp.eq.s32.totalorder %v35, %v13
  %vm80 = vcmp.eq.s32.totalorder %v38, %v13
  %vm81 = vcmp.eq.s32.totalorder %v41, %v13
  %vm82 = vcmp.eq.s32.totalorder %v44, %v13
  %vm83 = vcmp.eq.s32.totalorder %v47, %v13
  %vm84 = vcmp.eq.s32.totalorder %v50, %v13
  %vm85 = vcmp.eq.s32.totalorder %v53, %v13
  %vm86 = vcmp.eq.s32.totalorder %v56, %v13
  %vm87 = vcmp.eq.s32.totalorder %v59, %v13
  %vm88 = vcmp.eq.s32.totalorder %v62, %v13
  %vm89 = vcmp.eq.s32.totalorder %v65, %v13
  %vm90 = vcmp.eq.s32.totalorder %v68, %v13
  %vm91 = vcmp.eq.s32.totalorder %v71, %v13
  %vm92 = vcmp.eq.s32.totalorder %v74, %v13
  %vm93 = vcmp.eq.s32.totalorder %v77, %v13
  %v94 = vsel %vm78, 1, 0
  %v95 = vsel %vm79, 1, 0
  %v96 = vsel %vm80, 1, 0
  %v97 = vsel %vm81, 1, 0
  %v98 = vsel %vm82, 1, 0
  %v99 = vsel %vm83, 1, 0
  %v100 = vsel %vm84, 1, 0
  %v101 = vsel %vm85, 1, 0
  %v102 = vsel %vm86, 1, 0
  %v103 = vsel %vm87, 1, 0
  %v104 = vsel %vm88, 1, 0
  %v105 = vsel %vm89, 1, 0
  %v106 = vsel %vm90, 1, 0
  %v107 = vsel %vm91, 1, 0
  %v108 = vsel %vm92, 1, 0
  %v109 = vsel %vm93, 1, 0
  %v110 = vcvt.s32.f32 %v94
  %v111 = vcvt.s32.f32 %v95
  %v112 = vcvt.s32.f32 %v96
  %v113 = vcvt.s32.f32 %v97
  %v114 = vcvt.s32.f32 %v98
  %v115 = vcvt.s32.f32 %v99
  %v116 = vcvt.s32.f32 %v100
  %v117 = vcvt.s32.f32 %v101
  %v118 = vcvt.s32.f32 %v102
  %v119 = vcvt.s32.f32 %v103
  %v120 = vcvt.s32.f32 %v104
  %v121 = vcvt.s32.f32 %v105
  %v122 = vcvt.s32.f32 %v106
  %v123 = vcvt.s32.f32 %v107
  %v124 = vcvt.s32.f32 %v108
  %v125 = vcvt.s32.f32 %v109
  %v126 = vpack.c.bf16 %v111, %v110
  %v127 = vpack.c.bf16 %v113, %v112
  %v128 = vpack.c.bf16 %v115, %v114
  %v129 = vpack.c.bf16 %v117, %v116
  %v130 = vpack.c.bf16 %v119, %v118
  %v131 = vpack.c.bf16 %v121, %v120
  %v132 = vpack.c.bf16 %v123, %v122
  %v133 = vpack.c.bf16 %v125, %v124
  %v134 = vld [vmem:[%s1] sm:$0xf]
  %v135 = vld [vmem:[%s1 + $0x4] sm:$0xf]
  %v136 = vld [vmem:[%s1 + $0x8] sm:$0xf]
  %v137 = vld [vmem:[%s1 + $0xc] sm:$0xf]
  %v138 = vld [vmem:[%s1 + $0x10] sm:$0xf]
  %v139 = vld [vmem:[%s1 + $0x14] sm:$0xf]
  %v140 = vld [vmem:[%s1 + $0x18] sm:$0xf]
  %v141 = vld [vmem:[%s1 + $0x1c] sm:$0xf]
  %v142 = vld [vmem:[%s1 + $0x20] sm:$0xf]
  %v143 = vld [vmem:[%s1 + $0x24] sm:$0xf]
  %v144 = vld [vmem:[%s1 + $0x28] sm:$0xf]
  %v145 = vld [vmem:[%s1 + $0x2c] sm:$0xf]
  %v146 = vld [vmem:[%s1 + $0x30] sm:$0xf]
  %v147 = vld [vmem:[%s1 + $0x34] sm:$0xf]
  %v148 = vld [vmem:[%s1 + $0x38] sm:$0xf]
  %v149 = vld [vmem:[%s1 + $0x3c] sm:$0xf]
  %v166 = vunpack.c.l.b16 %v134
  %v167 = vunpack.c.l.b16 %v135
  %v168 = vunpack.c.l.b16 %v136
  %v169 = vunpack.c.l.b16 %v137
  %v170 = vunpack.c.l.b16 %v138
  %v171 = vunpack.c.l.b16 %v139
  %v172 = vunpack.c.l.b16 %v140
  %v173 = vunpack.c.l.b16 %v141
  %v174 = vunpack.c.l.b16 %v142
  %v175 = vunpack.c.l.b16 %v143
  %v176 = vunpack.c.l.b16 %v144
  %v177 = vunpack.c.l.b16 %v145
  %v178 = vunpack.c.l.b16 %v146
  %v179 = vunpack.c.l.b16 %v147
  %v180 = vunpack.c.l.b16 %v148
  %v181 = vunpack.c.l.b16 %v149
  %v182 = vpack.c.b16 %v167, %v166
  %v183 = vpack.c.b16 %v169, %v168
  %v184 = vpack.c.b16 %v171, %v170
  %v185 = vpack.c.b16 %v173, %v172
  %v186 = vpack.c.b16 %v175, %v174
  %v187 = vpack.c.b16 %v177, %v176
  %v188 = vpack.c.b16 %v179, %v178
  %v189 = vpack.c.b16 %v181, %v180
  %198 = vmatprep.subr.bf16.mxu0 0
  %199 = vmatpush1.bf16.msra.mxu0 %v189
  %200 = vmatprep.subr.bf16.mxu0 0
  %201 = vmatpush1.bf16.msra.mxu0 %v188
  %202 = vmatprep.subr.bf16.mxu0 0
  %203 = vmatpush1.bf16.msra.mxu0 %v187
  %204 = vmatprep.subr.bf16.mxu0 0
  %205 = vmatpush1.bf16.msra.mxu0 %v186
  %206 = vmatprep.subr.bf16.mxu0 0
  %207 = vmatpush1.bf16.msra.mxu0 %v185
  %208 = vmatprep.subr.bf16.mxu0 0
  %209 = vmatpush1.bf16.msra.mxu0 %v184
  %210 = vmatprep.subr.bf16.mxu0 0
  %211 = vmatpush1.bf16.msra.mxu0 %v183
  %212 = vmatprep.subr.bf16.mxu0 0
  %213 = vmatpush1.bf16.msra.mxu0 %v182
  %214 = vmatprep.subr.bf16.mxu0 0
  %215 = vmatpush2.bf16.msra.mxu0 0
  %216 = vmatprep.subr.bf16.mxu0 0
  %217 = vmatpush2.bf16.msra.mxu0 0
  %218 = vmatprep.subr.bf16.mxu0 0
  %219 = vmatpush2.bf16.msra.mxu0 0
  %220 = vmatprep.subr.bf16.mxu0 0
  %221 = vmatpush2.bf16.msra.mxu0 0
  %222 = vmatprep.subr.bf16.mxu0 0
  %223 = vmatpush2.bf16.msra.mxu0 0
  %224 = vmatprep.subr.bf16.mxu0 0
  %225 = vmatpush2.bf16.msra.mxu0 0
  %226 = vmatprep.subr.bf16.mxu0 0
  %227 = vmatpush2.bf16.msra.mxu0 0
  %228 = vmatprep.subr.bf16.mxu0 0
  %229 = vmatpush2.bf16.msra.mxu0 0
  %230 = vmatprep.mubr.bf16.mxu0 0
  %231 = vmatmul.mubr.bf16.gmra.mxu0 %v126
  %v232 = vpop.f32.mrf.mxu0
  %v233 = vadd.f32 0.0, %v232
  %v234 = vpop.f32.mrf.mxu0
  %v235 = vpop.f32.mrf.mxu0
  %v236 = vadd.f32 0.0, %v235
  %v237 = vpop.f32.mrf.mxu0
  %238 = vmatprep.mubr.bf16.mxu0 0
  %239 = vmatmul.mubr.bf16.gmra.mxu0 %v127
  %v240 = vpop.f32.mrf.mxu0
  %v241 = vadd.f32 0.0, %v240
  %v242 = vpop.f32.mrf.mxu0
  %v243 = vpop.f32.mrf.mxu0
  %v244 = vadd.f32 0.0, %v243
  %v245 = vpop.f32.mrf.mxu0
  %246 = vmatprep.mubr.bf16.mxu0 0
  %247 = vmatmul.mubr.bf16.gmra.mxu0 %v128
  %v248 = vpop.f32.mrf.mxu0
  %v249 = vadd.f32 0.0, %v248
  %v250 = vpop.f32.mrf.mxu0
  %v251 = vpop.f32.mrf.mxu0
  %v252 = vadd.f32 0.0, %v251
  %v253 = vpop.f32.mrf.mxu0
  %254 = vmatprep.mubr.bf16.mxu0 0
  %255 = vmatmul.mubr.bf16.gmra.mxu0 %v129
  %v256 = vpop.f32.mrf.mxu0
  %v257 = vadd.f32 0.0, %v256
  %v258 = vpop.f32.mrf.mxu0
  %v259 = vpop.f32.mrf.mxu0
  %v260 = vadd.f32 0.0, %v259
  %v261 = vpop.f32.mrf.mxu0
  %262 = vmatprep.mubr.bf16.mxu0 0
  %263 = vmatmul.mubr.bf16.gmra.mxu0 %v130
  %v264 = vpop.f32.mrf.mxu0
  %v265 = vadd.f32 0.0, %v264
  %v266 = vpop.f32.mrf.mxu0
  %v267 = vpop.f32.mrf.mxu0
  %v268 = vadd.f32 0.0, %v267
  %v269 = vpop.f32.mrf.mxu0
  %270 = vmatprep.mubr.bf16.mxu0 0
  %271 = vmatmul.mubr.bf16.gmra.mxu0 %v131
  %v272 = vpop.f32.mrf.mxu0
  %v273 = vadd.f32 0.0, %v272
  %v274 = vpop.f32.mrf.mxu0
  %v275 = vpop.f32.mrf.mxu0
  %v276 = vadd.f32 0.0, %v275
  %v277 = vpop.f32.mrf.mxu0
  %278 = vmatprep.mubr.bf16.mxu0 0
  %279 = vmatmul.mubr.bf16.gmra.mxu0 %v132
  %v280 = vpop.f32.mrf.mxu0
  %v281 = vadd.f32 0.0, %v280
  %v282 = vpop.f32.mrf.mxu0
  %v283 = vpop.f32.mrf.mxu0
  %v284 = vadd.f32 0.0, %v283
  %v285 = vpop.f32.mrf.mxu0
  %286 = vmatprep.mubr.bf16.mxu0 0
  %287 = vmatmul.mubr.bf16.gmra.mxu0 %v133
  %v288 = vpop.f32.mrf.mxu0
  %v289 = vadd.f32 0.0, %v288
  %v290 = vpop.f32.mrf.mxu0
  %v291 = vpop.f32.mrf.mxu0
  %v292 = vadd.f32 0.0, %v291
  %v293 = vpop.f32.mrf.mxu0
  %294 = vdwg.mxu0
  %295 = vst [vmem:[%s2] sm:$0xff] %v233
  %296 = vst [vmem:[%s2 + $0x8] sm:$0xff] %v236
  %297 = vst [vmem:[%s2 + $0x10] sm:$0xff] %v241
  %298 = vst [vmem:[%s2 + $0x18] sm:$0xff] %v244
  %299 = vst [vmem:[%s2 + $0x20] sm:$0xff] %v249
  %300 = vst [vmem:[%s2 + $0x28] sm:$0xff] %v252
  %301 = vst [vmem:[%s2 + $0x30] sm:$0xff] %v257
  %302 = vst [vmem:[%s2 + $0x38] sm:$0xff] %v260
  %303 = vst [vmem:[%s2 + $0x40] sm:$0xff] %v265
  %304 = vst [vmem:[%s2 + $0x48] sm:$0xff] %v268
  %305 = vst [vmem:[%s2 + $0x50] sm:$0xff] %v273
  %306 = vst [vmem:[%s2 + $0x58] sm:$0xff] %v276
  %307 = vst [vmem:[%s2 + $0x60] sm:$0xff] %v281
  %308 = vst [vmem:[%s2 + $0x68] sm:$0xff] %v284
  %309 = vst [vmem:[%s2 + $0x70] sm:$0xff] %v289
  %310 = vst [vmem:[%s2 + $0x78] sm:$0xff] %v292
  // Predicated region
  $region10: #{pool.3} parent=0 // pred_check
    _
  $region11: #{pool.3} parent=0 // pred_check_branch
    %312 = sbr.rel (0) target = $region13
  $region12: #{pool.3} parent=0 // pred_region
    _
  $region13: #{pool.3} parent=0 // pred_fallthru
    _
  // Predicated region
  $region14: #{pool.3} parent=0 // pred_check
    _
  $region15: #{pool.3} parent=0 // pred_check_branch
    %314 = sbr.rel (0) target = $region17
  $region16: #{pool.3} parent=0 // pred_region
    _
  $region17: #{pool.3} parent=0 // pred_fallthru
    _

// kernel: pool.2
$region0: #{pool.2}
  #allocation0 [shape = 'u32[]', space=smem, size = 0x4, offset = 0x4, fixed_abs, tag = 'smem constant byte address 0x4 - core index']
  #allocation1 [shape = 'u32[144,128]{1,0:T(1,128)}', space=vmem, size = 0x12000, scoped, tag = 'internal scratch']
  #allocation2 [shape = 'f32[128,128]{1,0:T(8,128)}', space=vmem, size = 0x10000, scoped, tag = 'scratch operand']
  #allocation3 [shape = 'f32[128,1]{1,0:T(8,128)}', space=vmem, size = 0x10000, scoped, tag = 'scratch operand']
  #allocation4 [shape = 's32[1]{0}', space=sflag, size = 0x4, scoped, tag = 'scoped memory for pool.2']
  #allocation5 [shape = 's32[1]{0:T(128)S(6)}', space=smem, size = 0x200, scoped, tag = 'prefetched SMEM operand 0']
  #allocation6 [shape = 's32[1]{0:T(128)S(6)}', space=smem, size = 0x200, scoped, tag = 'prefetched SMEM operand 1']
  %s0 = inlined_call_operand.<no memory space> [shape: s32[1], index: 0, kind: input, shape index: {}]
  %s1 = inlined_call_operand.<no memory space> [shape: s32[1], index: 1, kind: input, shape index: {}]
  %s2 = inlined_call_operand.vmem [shape: s32[128,1], index: 2, kind: input, shape index: {}]
  %s3 = inlined_call_operand.vmem [shape: s32[1,128], index: 3, kind: input, shape index: {}]
  %s4 = inlined_call_operand.vmem [shape: bf16[128,128], index: 4, kind: input, shape index: {}]
  %s5 = inlined_call_operand.vmem [shape: bf16[128,128], index: 5, kind: output, shape index: {}]
  %s6 = sld [smem:[#allocation0]]
  $region34: #{pool.2} parent=0
    _
  %s8 = ssub.s32 1, %s6
  %s9 = scalar_select 0, %s8, %s6
  %10 = sst [smem:[#allocation5]] %s0
  %11 = sst [smem:[#allocation6]] %s1
  // Predicated region
  $region2: #{pool.2} parent=0 // pred_check
    _
  $region3: #{pool.2} parent=0 // pred_check_branch
    %13 = sbr.rel (0) target = $region5
  $region4: #{pool.2} parent=0 // pred_region
    _
  $region5: #{pool.2} parent=0 // pred_fallthru
    _
  // Predicated region
  $region6: #{pool.2} parent=0 // pred_check
    _
  $region7: #{pool.2} parent=0 // pred_check_branch
    %15 = sbr.rel (0) target = $region9
  $region8: #{pool.2} parent=0 // pred_region
    _
  $region9: #{pool.2} parent=0 // pred_fallthru
    _
  // Predicated region
  $region10: #{pool.2} parent=0 // pred_check
    _
  $region11: #{pool.2} parent=0 // pred_check_branch
    %17 = sbr.rel (0) target = $region13
  $region12: #{pool.2} parent=0 // pred_region
    _
  $region13: #{pool.2} parent=0 // pred_fallthru
    _
  %p19 = scmp.eq.s32.totalorder 0, 0
  // Predicated region
  $region14: #{pool.2} parent=0 // pred_check
    %p20 = pneg %p19
  $region15: #{pool.2} parent=0 // pred_check_branch
    %22 = sbr.rel (%p20) target = $region17
  $region16: #{pool.2} parent=0 // pred_region
    %23 = vst [vmem:[#allocation2] sm:$0xff] 0.0
    %24 = vst [vmem:[#allocation2 + $0x8] sm:$0xff] 0.0
    %25 = vst [vmem:[#allocation2 + $0x10] sm:$0xff] 0.0
    %26 = vst [vmem:[#allocation2 + $0x18] sm:$0xff] 0.0
    %27 = vst [vmem:[#allocation2 + $0x20] sm:$0xff] 0.0
    %28 = vst [vmem:[#allocation2 + $0x28] sm:$0xff] 0.0
    %29 = vst [vmem:[#allocation2 + $0x30] sm:$0xff] 0.0
    %30 = vst [vmem:[#allocation2 + $0x38] sm:$0xff] 0.0
    %31 = vst [vmem:[#allocation2 + $0x40] sm:$0xff] 0.0
    %32 = vst [vmem:[#allocation2 + $0x48] sm:$0xff] 0.0
    %33 = vst [vmem:[#allocation2 + $0x50] sm:$0xff] 0.0
    %34 = vst [vmem:[#allocation2 + $0x58] sm:$0xff] 0.0
    %35 = vst [vmem:[#allocation2 + $0x60] sm:$0xff] 0.0
    %36 = vst [vmem:[#allocation2 + $0x68] sm:$0xff] 0.0
    %37 = vst [vmem:[#allocation2 + $0x70] sm:$0xff] 0.0
    %38 = vst [vmem:[#allocation2 + $0x78] sm:$0xff] 0.0
    %vm39 = vcmask 7168
    %40 = vst.msk [vmem:[#allocation3] sm:$0xff] %vm39, 0.0
    %41 = vst.msk [vmem:[#allocation3 + $0x8] sm:$0xff] %vm39, 0.0
    %42 = vst.msk [vmem:[#allocation3 + $0x10] sm:$0xff] %vm39, 0.0
    %43 = vst.msk [vmem:[#allocation3 + $0x18] sm:$0xff] %vm39, 0.0
    %44 = vst.msk [vmem:[#allocation3 + $0x20] sm:$0xff] %vm39, 0.0
    %45 = vst.msk [vmem:[#allocation3 + $0x28] sm:$0xff] %vm39, 0.0
    %46 = vst.msk [vmem:[#allocation3 + $0x30] sm:$0xff] %vm39, 0.0
    %47 = vst.msk [vmem:[#allocation3 + $0x38] sm:$0xff] %vm39, 0.0
    %48 = vst.msk [vmem:[#allocation3 + $0x40] sm:$0xff] %vm39, 0.0
    %49 = vst.msk [vmem:[#allocation3 + $0x48] sm:$0xff] %vm39, 0.0
    %50 = vst.msk [vmem:[#allocation3 + $0x50] sm:$0xff] %vm39, 0.0
    %51 = vst.msk [vmem:[#allocation3 + $0x58] sm:$0xff] %vm39, 0.0
    %52 = vst.msk [vmem:[#allocation3 + $0x60] sm:$0xff] %vm39, 0.0
    %53 = vst.msk [vmem:[#allocation3 + $0x68] sm:$0xff] %vm39, 0.0
    %54 = vst.msk [vmem:[#allocation3 + $0x70] sm:$0xff] %vm39, 0.0
    %55 = vst.msk [vmem:[#allocation3 + $0x78] sm:$0xff] %vm39, 0.0
  $region17: #{pool.2} parent=0 // pred_fallthru
    _
  %s56 = smul.u32 0, 128
  %s57 = sld [smem:[#allocation6]]
  %p58 = scmp.ge.s32.totalorder %s57, %s56
  %s59 = sld [smem:[#allocation5]]
  %s60 = sadd.s32 %s56, 128
  %p61 = scmp.lt.s32.totalorder %s59, %s60
  %p62 = pnand %p58, %p61
  %p63 = pneg %p62
  // Predicated region
  $region18: #{pool.2} parent=0 // pred_check
    _
  $region19: #{pool.2} parent=0 // pred_check_branch
    %65 = sbr.rel (%p62) target = $region21
  $region20: #{pool.2} parent=0 // pred_region
    %v66 = vld [vmem:[%s2] sm:$0xff]
    %v67 = vld [vmem:[%s2 + $0x8] sm:$0xff]
    %v68 = vld [vmem:[%s2 + $0x10] sm:$0xff]
    %v69 = vld [vmem:[%s2 + $0x18] sm:$0xff]
    %v70 = vld [vmem:[%s2 + $0x20] sm:$0xff]
    %v71 = vld [vmem:[%s2 + $0x28] sm:$0xff]
    %v72 = vld [vmem:[%s2 + $0x30] sm:$0xff]
    %v73 = vld [vmem:[%s2 + $0x38] sm:$0xff]
    %v74 = vld [vmem:[%s2 + $0x40] sm:$0xff]
    %v75 = vld [vmem:[%s2 + $0x48] sm:$0xff]
    %v76 = vld [vmem:[%s2 + $0x50] sm:$0xff]
    %v77 = vld [vmem:[%s2 + $0x58] sm:$0xff]
    %v78 = vld [vmem:[%s2 + $0x60] sm:$0xff]
    %v79 = vld [vmem:[%s2 + $0x68] sm:$0xff]
    %v80 = vld [vmem:[%s2 + $0x70] sm:$0xff]
    %v81 = vld [vmem:[%s2 + $0x78] sm:$0xff]
    %v82 = vld [vmem:[%s3] sm:$0x1]
    %83 = vset.pattern.permute.xlu0 0
    %84 = vperm.xlu0 %83, %v66
    %v85 = vpop.permute.xlu0 %84
    %86 = vset.pattern.permute.xlu0 0
    %87 = vperm.xlu0 %86, %v67
    %v88 = vpop.permute.xlu0 %87
    %89 = vset.pattern.permute.xlu0 0
    %90 = vperm.xlu0 %89, %v68
    %v91 = vpop.permute.xlu0 %90
    %92 = vset.pattern.permute.xlu0 0
    %93 = vperm.xlu0 %92, %v69
    %v94 = vpop.permute.xlu0 %93
    %95 = vset.pattern.permute.xlu0 0
    %96 = vperm.xlu0 %95, %v70
    %v97 = vpop.permute.xlu0 %96
    %98 = vset.pattern.permute.xlu0 0
    %99 = vperm.xlu0 %98, %v71
    %v100 = vpop.permute.xlu0 %99
    %101 = vset.pattern.permute.xlu0 0
    %102 = vperm.xlu0 %101, %v72
    %v103 = vpop.permute.xlu0 %102
    %104 = vset.pattern.permute.xlu0 0
    %105 = vperm.xlu0 %104, %v73
    %v106 = vpop.permute.xlu0 %105
    %107 = vset.pattern.permute.xlu0 0
    %108 = vperm.xlu0 %107, %v74
    %v109 = vpop.permute.xlu0 %108
    %110 = vset.pattern.permute.xlu0 0
    %111 = vperm.xlu0 %110, %v75
    %v112 = vpop.permute.xlu0 %111
    %113 = vset.pattern.permute.xlu0 0
    %114 = vperm.xlu0 %113, %v76
    %v115 = vpop.permute.xlu0 %114
    %116 = vset.pattern.permute.xlu0 0
    %117 = vperm.xlu0 %116, %v77
    %v118 = vpop.permute.xlu0 %117
    %119 = vset.pattern.permute.xlu0 0
    %120 = vperm.xlu0 %119, %v78
    %v121 = vpop.permute.xlu0 %120
    %122 = vset.pattern.permute.xlu0 0
    %123 = vperm.xlu0 %122, %v79
    %v124 = vpop.permute.xlu0 %123
    %125 = vset.pattern.permute.xlu0 0
    %126 = vperm.xlu0 %125, %v80
    %v127 = vpop.permute.xlu0 %126
    %128 = vset.pattern.permute.xlu0 0
    %129 = vperm.xlu0 %128, %v81
    %v130 = vpop.permute.xlu0 %129
    %v131 = vlaneseq
    %v132 = vshrl.u32 %v131, 7
    %v133 = vsub.s32 0, %v132
    %v134 = vrot.slane %v82, %v133
    %vm135 = vcmp.eq.s32.totalorder %v85, %v134
    %vm136 = vcmp.eq.s32.totalorder %v88, %v134
    %vm137 = vcmp.eq.s32.totalorder %v91, %v134
    %vm138 = vcmp.eq.s32.totalorder %v94, %v134
    %vm139 = vcmp.eq.s32.totalorder %v97, %v134
    %vm140 = vcmp.eq.s32.totalorder %v100, %v134
    %vm141 = vcmp.eq.s32.totalorder %v103, %v134
    %vm142 = vcmp.eq.s32.totalorder %v106, %v134
    %vm143 = vcmp.eq.s32.totalorder %v109, %v134
    %vm144 = vcmp.eq.s32.totalorder %v112, %v134
    %vm145 = vcmp.eq.s32.totalorder %v115, %v134
    %vm146 = vcmp.eq.s32.totalorder %v118, %v134
    %vm147 = vcmp.eq.s32.totalorder %v121, %v134
    %vm148 = vcmp.eq.s32.totalorder %v124, %v134
    %vm149 = vcmp.eq.s32.totalorder %v127, %v134
    %vm150 = vcmp.eq.s32.totalorder %v130, %v134
    %v151 = vsel %vm135, 1, 0
    %v152 = vsel %vm136, 1, 0
    %v153 = vsel %vm137, 1, 0
    %v154 = vsel %vm138, 1, 0
    %v155 = vsel %vm139, 1, 0
    %v156 = vsel %vm140, 1, 0
    %v157 = vsel %vm141, 1, 0
    %v158 = vsel %vm142, 1, 0
    %v159 = vsel %vm143, 1, 0
    %v160 = vsel %vm144, 1, 0
    %v161 = vsel %vm145, 1, 0
    %v162 = vsel %vm146, 1, 0
    %v163 = vsel %vm147, 1, 0
    %v164 = vsel %vm148, 1, 0
    %v165 = vsel %vm149, 1, 0
    %v166 = vsel %vm150, 1, 0
    %v167 = vcvt.s32.f32 %v151
    %v168 = vcvt.s32.f32 %v152
    %v169 = vcvt.s32.f32 %v153
    %v170 = vcvt.s32.f32 %v154
    %v171 = vcvt.s32.f32 %v155
    %v172 = vcvt.s32.f32 %v156
    %v173 = vcvt.s32.f32 %v157
    %v174 = vcvt.s32.f32 %v158
    %v175 = vcvt.s32.f32 %v159
    %v176 = vcvt.s32.f32 %v160
    %v177 = vcvt.s32.f32 %v161
    %v178 = vcvt.s32.f32 %v162
    %v179 = vcvt.s32.f32 %v163
    %v180 = vcvt.s32.f32 %v164
    %v181 = vcvt.s32.f32 %v165
    %v182 = vcvt.s32.f32 %v166
    %v183 = vpack.c.bf16 %v168, %v167
    %v184 = vpack.c.bf16 %v170, %v169
    %v185 = vpack.c.bf16 %v172, %v171
    %v186 = vpack.c.bf16 %v174, %v173
    %v187 = vpack.c.bf16 %v176, %v175
    %v188 = vpack.c.bf16 %v178, %v177
    %v189 = vpack.c.bf16 %v180, %v179
    %v190 = vpack.c.bf16 %v182, %v181
    %v191 = vld [vmem:[#allocation2] sm:$0xff]
    %v192 = vld [vmem:[#allocation2 + $0x8] sm:$0xff]
    %v193 = vld [vmem:[#allocation2 + $0x10] sm:$0xff]
    %v194 = vld [vmem:[#allocation2 + $0x18] sm:$0xff]
    %v195 = vld [vmem:[#allocation2 + $0x20] sm:$0xff]
    %v196 = vld [vmem:[#allocation2 + $0x28] sm:$0xff]
    %v197 = vld [vmem:[#allocation2 + $0x30] sm:$0xff]
    %v198 = vld [vmem:[#allocation2 + $0x38] sm:$0xff]
    %v199 = vld [vmem:[#allocation2 + $0x40] sm:$0xff]
    %v200 = vld [vmem:[#allocation2 + $0x48] sm:$0xff]
    %v201 = vld [vmem:[#allocation2 + $0x50] sm:$0xff]
    %v202 = vld [vmem:[#allocation2 + $0x58] sm:$0xff]
    %v203 = vld [vmem:[#allocation2 + $0x60] sm:$0xff]
    %v204 = vld [vmem:[#allocation2 + $0x68] sm:$0xff]
    %v205 = vld [vmem:[#allocation2 + $0x70] sm:$0xff]
    %v206 = vld [vmem:[#allocation2 + $0x78] sm:$0xff]
    %v207 = vld [vmem:[%s4] sm:$0xf]
    %v208 = vld [vmem:[%s4 + $0x4] sm:$0xf]
    %v209 = vld [vmem:[%s4 + $0x8] sm:$0xf]
    %v210 = vld [vmem:[%s4 + $0xc] sm:$0xf]
    %v211 = vld [vmem:[%s4 + $0x10] sm:$0xf]
    %v212 = vld [vmem:[%s4 + $0x14] sm:$0xf]
    %v213 = vld [vmem:[%s4 + $0x18] sm:$0xf]
    %v214 = vld [vmem:[%s4 + $0x1c] sm:$0xf]
    %v215 = vld [vmem:[%s4 + $0x20] sm:$0xf]
    %v216 = vld [vmem:[%s4 + $0x24] sm:$0xf]
    %v217 = vld [vmem:[%s4 + $0x28] sm:$0xf]
    %v218 = vld [vmem:[%s4 + $0x2c] sm:$0xf]
    %v219 = vld [vmem:[%s4 + $0x30] sm:$0xf]
    %v220 = vld [vmem:[%s4 + $0x34] sm:$0xf]
    %v221 = vld [vmem:[%s4 + $0x38] sm:$0xf]
    %v222 = vld [vmem:[%s4 + $0x3c] sm:$0xf]
    %v239 = vunpack.c.l.b16 %v207
    %v240 = vunpack.c.l.b16 %v208
    %v241 = vunpack.c.l.b16 %v209
    %v242 = vunpack.c.l.b16 %v210
    %v243 = vunpack.c.l.b16 %v211
    %v244 = vunpack.c.l.b16 %v212
    %v245 = vunpack.c.l.b16 %v213
    %v246 = vunpack.c.l.b16 %v214
    %v247 = vunpack.c.l.b16 %v215
    %v248 = vunpack.c.l.b16 %v216
    %v249 = vunpack.c.l.b16 %v217
    %v250 = vunpack.c.l.b16 %v218
    %v251 = vunpack.c.l.b16 %v219
    %v252 = vunpack.c.l.b16 %v220
    %v253 = vunpack.c.l.b16 %v221
    %v254 = vunpack.c.l.b16 %v222
    %v255 = vpack.c.b16 %v240, %v239
    %v256 = vpack.c.b16 %v242, %v241
    %v257 = vpack.c.b16 %v244, %v243
    %v258 = vpack.c.b16 %v246, %v245
    %v259 = vpack.c.b16 %v248, %v247
    %v260 = vpack.c.b16 %v250, %v249
    %v261 = vpack.c.b16 %v252, %v251
    %v262 = vpack.c.b16 %v254, %v253
    %271 = vmatprep.subr.bf16.mxu0 0
    %272 = vmatpush1.bf16.msra.mxu0 %v262
    %273 = vmatprep.subr.bf16.mxu0 0
    %274 = vmatpush1.bf16.msra.mxu0 %v261
    %275 = vmatprep.subr.bf16.mxu0 0
    %276 = vmatpush1.bf16.msra.mxu0 %v260
    %277 = vmatprep.subr.bf16.mxu0 0
    %278 = vmatpush1.bf16.msra.mxu0 %v259
    %279 = vmatprep.subr.bf16.mxu0 0
    %280 = vmatpush1.bf16.msra.mxu0 %v258
    %281 = vmatprep.subr.bf16.mxu0 0
    %282 = vmatpush1.bf16.msra.mxu0 %v257
    %283 = vmatprep.subr.bf16.mxu0 0
    %284 = vmatpush1.bf16.msra.mxu0 %v256
    %285 = vmatprep.subr.bf16.mxu0 0
    %286 = vmatpush1.bf16.msra.mxu0 %v255
    %287 = vmatprep.subr.bf16.mxu0 0
    %288 = vmatpush2.bf16.msra.mxu0 0
    %289 = vmatprep.subr.bf16.mxu0 0
    %290 = vmatpush2.bf16.msra.mxu0 0
    %291 = vmatprep.subr.bf16.mxu0 0
    %292 = vmatpush2.bf16.msra.mxu0 0
    %293 = vmatprep.subr.bf16.mxu0 0
    %294 = vmatpush2.bf16.msra.mxu0 0
    %295 = vmatprep.subr.bf16.mxu0 0
    %296 = vmatpush2.bf16.msra.mxu0 0
    %297 = vmatprep.subr.bf16.mxu0 0
    %298 = vmatpush2.bf16.msra.mxu0 0
    %299 = vmatprep.subr.bf16.mxu0 0
    %300 = vmatpush2.bf16.msra.mxu0 0
    %301 = vmatprep.subr.bf16.mxu0 0
    %302 = vmatpush2.bf16.msra.mxu0 0
    %303 = vmatprep.mubr.bf16.mxu0 0
    %304 = vmatmul.mubr.bf16.gmra.mxu0 %v183
    %v305 = vpop.f32.mrf.mxu0
    %v306 = vadd.f32 0.0, %v305
    %v307 = vpop.f32.mrf.mxu0
    %v308 = vpop.f32.mrf.mxu0
    %v309 = vadd.f32 0.0, %v308
    %v310 = vpop.f32.mrf.mxu0
    %311 = vmatprep.mubr.bf16.mxu0 0
    %312 = vmatmul.mubr.bf16.gmra.mxu0 %v184
    %v313 = vpop.f32.mrf.mxu0
    %v314 = vadd.f32 0.0, %v313
    %v315 = vpop.f32.mrf.mxu0
    %v316 = vpop.f32.mrf.mxu0
    %v317 = vadd.f32 0.0, %v316
    %v318 = vpop.f32.mrf.mxu0
    %319 = vmatprep.mubr.bf16.mxu0 0
    %320 = vmatmul.mubr.bf16.gmra.mxu0 %v185
    %v321 = vpop.f32.mrf.mxu0
    %v322 = vadd.f32 0.0, %v321
    %v323 = vpop.f32.mrf.mxu0
    %v324 = vpop.f32.mrf.mxu0
    %v325 = vadd.f32 0.0, %v324
    %v326 = vpop.f32.mrf.mxu0
    %327 = vmatprep.mubr.bf16.mxu0 0
    %328 = vmatmul.mubr.bf16.gmra.mxu0 %v186
    %v329 = vpop.f32.mrf.mxu0
    %v330 = vadd.f32 0.0, %v329
    %v331 = vpop.f32.mrf.mxu0
    %v332 = vpop.f32.mrf.mxu0
    %v333 = vadd.f32 0.0, %v332
    %v334 = vpop.f32.mrf.mxu0
    %335 = vmatprep.mubr.bf16.mxu0 0
    %336 = vmatmul.mubr.bf16.gmra.mxu0 %v187
    %v337 = vpop.f32.mrf.mxu0
    %v338 = vadd.f32 0.0, %v337
    %v339 = vpop.f32.mrf.mxu0
    %v340 = vpop.f32.mrf.mxu0
    %v341 = vadd.f32 0.0, %v340
    %v342 = vpop.f32.mrf.mxu0
    %343 = vmatprep.mubr.bf16.mxu0 0
    %344 = vmatmul.mubr.bf16.gmra.mxu0 %v188
    %v345 = vpop.f32.mrf.mxu0
    %v346 = vadd.f32 0.0, %v345
    %v347 = vpop.f32.mrf.mxu0
    %v348 = vpop.f32.mrf.mxu0
    %v349 = vadd.f32 0.0, %v348
    %v350 = vpop.f32.mrf.mxu0
    %351 = vmatprep.mubr.bf16.mxu0 0
    %352 = vmatmul.mubr.bf16.gmra.mxu0 %v189
    %v353 = vpop.f32.mrf.mxu0
    %v354 = vadd.f32 0.0, %v353
    %v355 = vpop.f32.mrf.mxu0
    %v356 = vpop.f32.mrf.mxu0
    %v357 = vadd.f32 0.0, %v356
    %v358 = vpop.f32.mrf.mxu0
    %359 = vmatprep.mubr.bf16.mxu0 0
    %360 = vmatmul.mubr.bf16.gmra.mxu0 %v190
    %v361 = vpop.f32.mrf.mxu0
    %v362 = vadd.f32 0.0, %v361
    %v363 = vpop.f32.mrf.mxu0
    %v364 = vpop.f32.mrf.mxu0
    %v365 = vadd.f32 0.0, %v364
    %v366 = vpop.f32.mrf.mxu0
    %367 = vdwg.mxu0
    %v368 = vadd.f32 %v191, %v306
    %v369 = vadd.f32 %v192, %v309
    %v370 = vadd.f32 %v193, %v314
    %v371 = vadd.f32 %v194, %v317
    %v372 = vadd.f32 %v195, %v322
    %v373 = vadd.f32 %v196, %v325
    %v374 = vadd.f32 %v197, %v330
    %v375 = vadd.f32 %v198, %v333
    %v376 = vadd.f32 %v199, %v338
    %v377 = vadd.f32 %v200, %v341
    %v378 = vadd.f32 %v201, %v346
    %v379 = vadd.f32 %v202, %v349
    %v380 = vadd.f32 %v203, %v354
    %v381 = vadd.f32 %v204, %v357
    %v382 = vadd.f32 %v205, %v362
    %v383 = vadd.f32 %v206, %v365
    %384 = vst [vmem:[#allocation2] sm:$0xff] %v368
    %385 = vst [vmem:[#allocation2 + $0x8] sm:$0xff] %v369
    %386 = vst [vmem:[#allocation2 + $0x10] sm:$0xff] %v370
    %387 = vst [vmem:[#allocation2 + $0x18] sm:$0xff] %v371
    %388 = vst [vmem:[#allocation2 + $0x20] sm:$0xff] %v372
    %389 = vst [vmem:[#allocation2 + $0x28] sm:$0xff] %v373
    %390 = vst [vmem:[#allocation2 + $0x30] sm:$0xff] %v374
    %391 = vst [vmem:[#allocation2 + $0x38] sm:$0xff] %v375
    %392 = vst [vmem:[#allocation2 + $0x40] sm:$0xff] %v376
    %393 = vst [vmem:[#allocation2 + $0x48] sm:$0xff] %v377
    %394 = vst [vmem:[#allocation2 + $0x50] sm:$0xff] %v378
    %395 = vst [vmem:[#allocation2 + $0x58] sm:$0xff] %v379
    %396 = vst [vmem:[#allocation2 + $0x60] sm:$0xff] %v380
    %397 = vst [vmem:[#allocation2 + $0x68] sm:$0xff] %v381
    %398 = vst [vmem:[#allocation2 + $0x70] sm:$0xff] %v382
    %399 = vst [vmem:[#allocation2 + $0x78] sm:$0xff] %v383
  $region21: #{pool.2} parent=0 // pred_fallthru
    _
  // Predicated region
  $region22: #{pool.2} parent=0 // pred_check
    %p400 = pneg %p19
  $region23: #{pool.2} parent=0 // pred_check_branch
    %402 = sbr.rel (%p400) target = $region25
  $region24: #{pool.2} parent=0 // pred_region
    %v403 = vld [vmem:[#allocation2] sm:$0xff]
    %v404 = vld [vmem:[#allocation2 + $0x8] sm:$0xff]
    %v405 = vld [vmem:[#allocation2 + $0x10] sm:$0xff]
    %v406 = vld [vmem:[#allocation2 + $0x18] sm:$0xff]
    %v407 = vld [vmem:[#allocation2 + $0x20] sm:$0xff]
    %v408 = vld [vmem:[#allocation2 + $0x28] sm:$0xff]
    %v409 = vld [vmem:[#allocation2 + $0x30] sm:$0xff]
    %v410 = vld [vmem:[#allocation2 + $0x38] sm:$0xff]
    %v411 = vld [vmem:[#allocation2 + $0x40] sm:$0xff]
    %v412 = vld [vmem:[#allocation2 + $0x48] sm:$0xff]
    %v413 = vld [vmem:[#allocation2 + $0x50] sm:$0xff]
    %v414 = vld [vmem:[#allocation2 + $0x58] sm:$0xff]
    %v415 = vld [vmem:[#allocation2 + $0x60] sm:$0xff]
    %v416 = vld [vmem:[#allocation2 + $0x68] sm:$0xff]
    %v417 = vld [vmem:[#allocation2 + $0x70] sm:$0xff]
    %v418 = vld [vmem:[#allocation2 + $0x78] sm:$0xff]
    %v419 = vmax.f32 %v403, 1.0
    %v420 = vmax.f32 %v404, 1.0
    %v421 = vmax.f32 %v405, 1.0
    %v422 = vmax.f32 %v406, 1.0
    %v423 = vmax.f32 %v407, 1.0
    %v424 = vmax.f32 %v408, 1.0
    %v425 = vmax.f32 %v409, 1.0
    %v426 = vmax.f32 %v410, 1.0
    %v427 = vmax.f32 %v411, 1.0
    %v428 = vmax.f32 %v412, 1.0
    %v429 = vmax.f32 %v413, 1.0
    %v430 = vmax.f32 %v414, 1.0
    %v431 = vmax.f32 %v415, 1.0
    %v432 = vmax.f32 %v416, 1.0
    %v433 = vmax.f32 %v417, 1.0
    %v434 = vmax.f32 %v418, 1.0
    %v435 = vrcp.pop %v419
    %v436 = vrcp.pop %v420
    %v437 = vrcp.pop %v421
    %v438 = vrcp.pop %v422
    %v439 = vrcp.pop %v423
    %v440 = vrcp.pop %v424
    %v441 = vrcp.pop %v425
    %v442 = vrcp.pop %v426
    %v443 = vrcp.pop %v427
    %v444 = vrcp.pop %v428
    %v445 = vrcp.pop %v429
    %v446 = vrcp.pop %v430
    %v447 = vrcp.pop %v431
    %v448 = vrcp.pop %v432
    %v449 = vrcp.pop %v433
    %v450 = vrcp.pop %v434
    %452 = vset.pattern.permute.xlu0 4
    %453 = vperm.xlu0 %452, %v435
    %v454 = vpop.permute.xlu0 %453
    %457 = vset.pattern.permute.xlu0 4
    %458 = vperm.xlu0 %457, %v436
    %v459 = vpop.permute.xlu0 %458
    %462 = vset.pattern.permute.xlu0 4
    %463 = vperm.xlu0 %462, %v437
    %v464 = vpop.permute.xlu0 %463
    %467 = vset.pattern.permute.xlu0 4
    %468 = vperm.xlu0 %467, %v438
    %v469 = vpop.permute.xlu0 %468
    %472 = vset.pattern.permute.xlu0 4
    %473 = vperm.xlu0 %472, %v439
    %v474 = vpop.permute.xlu0 %473
    %477 = vset.pattern.permute.xlu0 4
    %478 = vperm.xlu0 %477, %v440
    %v479 = vpop.permute.xlu0 %478
    %482 = vset.pattern.permute.xlu0 4
    %483 = vperm.xlu0 %482, %v441
    %v484 = vpop.permute.xlu0 %483
    %487 = vset.pattern.permute.xlu0 4
    %488 = vperm.xlu0 %487, %v442
    %v489 = vpop.permute.xlu0 %488
    %492 = vset.pattern.permute.xlu0 4
    %493 = vperm.xlu0 %492, %v443
    %v494 = vpop.permute.xlu0 %493
    %497 = vset.pattern.permute.xlu0 4
    %498 = vperm.xlu0 %497, %v444
    %v499 = vpop.permute.xlu0 %498
    %502 = vset.pattern.permute.xlu0 4
    %503 = vperm.xlu0 %502, %v445
    %v504 = vpop.permute.xlu0 %503
    %507 = vset.pattern.permute.xlu0 4
    %508 = vperm.xlu0 %507, %v446
    %v509 = vpop.permute.xlu0 %508
    %512 = vset.pattern.permute.xlu0 4
    %513 = vperm.xlu0 %512, %v447
    %v514 = vpop.permute.xlu0 %513
    %517 = vset.pattern.permute.xlu0 4
    %518 = vperm.xlu0 %517, %v448
    %v519 = vpop.permute.xlu0 %518
    %522 = vset.pattern.permute.xlu0 4
    %523 = vperm.xlu0 %522, %v449
    %v524 = vpop.permute.xlu0 %523
    %527 = vset.pattern.permute.xlu0 4
    %528 = vperm.xlu0 %527, %v450
    %v529 = vpop.permute.xlu0 %528
    %v531 = vmul.f32 %v403, %v454
    %v532 = vmul.f32 %v404, %v459
    %v533 = vmul.f32 %v405, %v464
    %v534 = vmul.f32 %v406, %v469
    %v535 = vmul.f32 %v407, %v474
    %v536 = vmul.f32 %v408, %v479
    %v537 = vmul.f32 %v409, %v484
    %v538 = vmul.f32 %v410, %v489
    %v539 = vmul.f32 %v411, %v494
    %v540 = vmul.f32 %v412, %v499
    %v541 = vmul.f32 %v413, %v504
    %v542 = vmul.f32 %v414, %v509
    %v543 = vmul.f32 %v415, %v514
    %v544 = vmul.f32 %v416, %v519
    %v545 = vmul.f32 %v417, %v524
    %v546 = vmul.f32 %v418, %v529
    %v547 = vpack.c.bf16 %v532, %v531
    %v548 = vpack.c.bf16 %v534, %v533
    %v549 = vpack.c.bf16 %v536, %v535
    %v550 = vpack.c.bf16 %v538, %v537
    %v551 = vpack.c.bf16 %v540, %v539
    %v552 = vpack.c.bf16 %v542, %v541
    %v553 = vpack.c.bf16 %v544, %v543
    %v554 = vpack.c.bf16 %v546, %v545
    %v563 = vunpack.c.l.b16 %v547
    %v564 = vunpack.c.h.b16 %v547
    %v565 = vunpack.c.l.b16 %v548
    %v566 = vunpack.c.h.b16 %v548
    %v567 = vunpack.c.l.b16 %v549
    %v568 = vunpack.c.h.b16 %v549
    %v569 = vunpack.c.l.b16 %v550
    %v570 = vunpack.c.h.b16 %v550
    %v571 = vunpack.c.l.b16 %v551
    %v572 = vunpack.c.h.b16 %v551
    %v573 = vunpack.c.l.b16 %v552
    %v574 = vunpack.c.h.b16 %v552
    %v575 = vunpack.c.l.b16 %v553
    %v576 = vunpack.c.h.b16 %v553
    %v577 = vunpack.c.l.b16 %v554
    %v578 = vunpack.c.h.b16 %v554
    %v579 = vpack.c.b16 %v563, %v563
    %v580 = vpack.c.b16 %v564, %v564
    %v581 = vpack.c.b16 %v565, %v565
    %v582 = vpack.c.b16 %v566, %v566
    %v583 = vpack.c.b16 %v567, %v567
    %v584 = vpack.c.b16 %v568, %v568
    %v585 = vpack.c.b16 %v569, %v569
    %v586 = vpack.c.b16 %v570, %v570
    %v587 = vpack.c.b16 %v571, %v571
    %v588 = vpack.c.b16 %v572, %v572
    %v589 = vpack.c.b16 %v573, %v573
    %v590 = vpack.c.b16 %v574, %v574
    %v591 = vpack.c.b16 %v575, %v575
    %v592 = vpack.c.b16 %v576, %v576
    %v593 = vpack.c.b16 %v577, %v577
    %v594 = vpack.c.b16 %v578, %v578
    %611 = vst [vmem:[%s5] sm:$0xf] %v579
    %612 = vst [vmem:[%s5 + $0x4] sm:$0xf] %v580
    %613 = vst [vmem:[%s5 + $0x8] sm:$0xf] %v581
    %614 = vst [vmem:[%s5 + $0xc] sm:$0xf] %v582
    %615 = vst [vmem:[%s5 + $0x10] sm:$0xf] %v583
    %616 = vst [vmem:[%s5 + $0x14] sm:$0xf] %v584
    %617 = vst [vmem:[%s5 + $0x18] sm:$0xf] %v585
    %618 = vst [vmem:[%s5 + $0x1c] sm:$0xf] %v586
    %619 = vst [vmem:[%s5 + $0x20] sm:$0xf] %v587
    %620 = vst [vmem:[%s5 + $0x24] sm:$0xf] %v588
    %621 = vst [vmem:[%s5 + $0x28] sm:$0xf] %v589
    %622 = vst [vmem:[%s5 + $0x2c] sm:$0xf] %v590
    %623 = vst [vmem:[%s5 + $0x30] sm:$0xf] %v591
    %624 = vst [vmem:[%s5 + $0x34] sm:$0xf] %v592
    %625 = vst [vmem:[%s5 + $0x38] sm:$0xf] %v593
    %626 = vst [vmem:[%s5 + $0x3c] sm:$0xf] %v594
  $region25: #{pool.2} parent=0 // pred_fallthru
    _
  // Predicated region
  $region26: #{pool.2} parent=0 // pred_check
    _
  $region27: #{pool.2} parent=0 // pred_check_branch
    %628 = sbr.rel (0) target = $region29
  $region28: #{pool.2} parent=0 // pred_region
    _
  $region29: #{pool.2} parent=0 // pred_fallthru
    _
  // Predicated region
  $region30: #{pool.2} parent=0 // pred_check
    _
  $region31: #{pool.2} parent=0 // pred_check_branch
    %630 = sbr.rel (0) target = $region33
  $region32: #{pool.2} parent=0 // pred_region
    _
  $region33: #{pool.2} parent=0 // pred_fallthru
    _

</llo_original>
